<compile_context>
chip_gen: v6e
topology: v6e:2x2x1
jax: 0.10.0
libtpu: 0.0.40
codegen_flags: <defaults>
</compile_context>

<pallas_src>
import functools

import numpy as np

import jax
import jax.numpy as jnp
from jax import lax
from jax.experimental import pallas as pl
from jax.experimental.pallas import tpu as pltpu


def _stencil_kernel(x_ref, o_ref, *, groups, period):
    """groups: tuple of (coeff, shifts); shifts are center-anchored flat offsets
    into the H*W lane axis.  coeff already includes the 1/resol factor."""
    x = x_ref[...]                       # (F, H*W) float32, one frame per lane row
    out = None
    for coeff, shifts in groups:
        g = None
        for s in shifts:
            # Want t[p] = x[p + s]; pltpu.roll uses jnp.roll semantics
            # (positive shift rotates right), so shift = (-s) mod period.
            t = x if s == 0 else pltpu.roll(x, shift=(-s) % period, axis=1)
            g = t if g is None else g + t
        term = g if coeff == 1.0 else g * coeff
        out = term if out is None else out + term
    if out is None:                      # degenerate all-zero filter
        out = jnp.zeros_like(x)
    o_ref[...] = out.astype(o_ref.dtype)


def _frames_per_block(n_frames, frame_bytes, target_bytes):
    """Frames per grid block: a multiple of 8 (sublane rule) that keeps each
    block under target_bytes and the grid at >= 2 steps (pipelining + v7x
    megacore sharding).  Tiny batches (<= 8 frames) use the whole batch, which
    is legal because the block then equals the full array dim."""
    if n_frames <= 8:
        return n_frames
    by_size = (target_bytes // frame_bytes) // 8 * 8
    by_steps = (((n_frames + 1) // 2) + 7) // 8 * 8
    # TODO(synk): when a single frame exceeds target_bytes (by_size == 0), tile
    # rows within a frame with a (K-1)-row halo instead of relying on a raised
    # vmem limit; matters for very large frames on v7x's 64 MiB VMEM.
    return max(8, min(by_size, by_steps))


def conv2d_derivative(x_nchw, der_filter, resol, *, target_block_bytes=None):
    """Pallas equivalent of Conv2dDerivative.forward:
    conv2d(valid, stride 1, bias=False, fixed filter) / resol.

    x_nchw:     (N, 1, H, W) float32
    der_filter: (1, 1, K, K) fixed, non-trainable stencil (host-concrete)
    resol:      python float
    """
    N, C, H, W = x_nchw.shape
    assert C == 1, "Conv2dDerivative has a single input channel"
    w_np = np.asarray(jax.device_get(der_filter), dtype=np.float32)
    K = int(w_np.shape[-1])
    w_np = w_np.reshape(K, K)
    Ho, Wo = H - K + 1, W - K + 1
    assert Ho > 0 and Wo > 0
    a = K // 2                    # center anchor; valid window = [a, a+Ho) x [a, a+Wo)
    P = H * W
    inv = 1.0 / float(resol)

    # Bake (tap / resol) as compile-time constants, drop exact zeros, and group
    # taps sharing a coefficient so each group needs a single multiply.
    groups_d = {}
    for ki in range(K):
        for kj in range(K):
            v = float(w_np[ki, kj])
            if v == 0.0:
                continue
            s = (ki - a) * W + (kj - a)          # center-anchored flat shift
            groups_d.setdefault(v * inv, []).append(s)
    groups = tuple((c, tuple(shifts)) for c, shifts in groups_d.items())

    # One frame per lane row -> lane-dense blocks, unmasked stores, frame
    # alignment of every block is automatic (no wrap-junk leakage possible).
    x2d = x_nchw.astype(jnp.float32).reshape(N, P)
    frame_bytes = P * 4

    try:
        vmem_cap = int(pltpu.get_tpu_info().vmem_capacity_bytes)
    except Exception:
        vmem_cap = 64 * 1024 * 1024              # conservative (v7x per-TC) fallback
    usable_vmem = (vmem_cap * 3) // 4            # ~96 MiB v5e/v6e, ~48 MiB v7x
    if target_block_bytes is None:
        # 2x in + 2x out double buffers + ~3-4x block of live temporaries fit
        # comfortably in `usable_vmem` at this size.
        target_block_bytes = max(1 << 20, usable_vmem // 12)   # ~8 MiB / ~4 MiB

    fp = _frames_per_block(N, frame_bytes, target_block_bytes)
    grid = (pl.cdiv(N, fp),)
    block_bytes = fp * frame_bytes
    vmem_limit = int(min(usable_vmem, max(32 * 1024 * 1024, 10 * block_bytes)))

    kernel = functools.partial(_stencil_kernel, groups=groups, period=P)

    out2d = pl.pallas_call(
        kernel,
        out_shape=jax.ShapeDtypeStruct((N, P), jnp.float32),
        grid_spec=pltpu.PrefetchScalarGridSpec(
            num_scalar_prefetch=0,
            grid=grid,
            in_specs=[pl.BlockSpec((fp, P), lambda i: (i, 0))],
            out_specs=pl.BlockSpec((fp, P), lambda i: (i, 0)),
        ),
        compiler_params=pltpu.CompilerParams(
            dimension_semantics=("parallel",),   # shards steps across v7x's 2 TCs
            vmem_limit_bytes=vmem_limit,
        ),
    )(x2d)

    # Strip the borders holding wrap/neighbor junk: keep the valid Ho x Wo
    # window per frame (one extra XLA copy; fuse into the consumer if hot).
    out = out2d.reshape(N, H, W)[:, a:a + Ho, a:a + Wo]
    return out.reshape(N, 1, Ho, Wo)


if __name__ == "__main__":
    # Fixed "DerFilter": scaled Laplacian stencil, shape (1,1,3,3) exactly as
    # nn.Conv2d(1, 1, 3, bias=False).weight expects.
    der_filter = np.array(
        [[[[0.0, 1.0, 0.0],
           [1.0, -4.0, 1.0],
           [0.0, 1.0, 0.0]]]], dtype=np.float32)
    resol = (1.0 / 16.0) ** 2  # e.g. dx**2 for a second derivative

    key = jax.random.PRNGKey(0)
    x = jax.random.normal(key, (2, 1, 16, 16), dtype=jnp.float32)

    y = conv2d_derivative(x, der_filter, resol)
    y = jax.block_until_ready(y)

    # Pure-JAX reference (valid cross-correlation, NCHW) for a sanity check.
    y_ref = lax.conv_general_dilated(
        x, jnp.asarray(der_filter), window_strides=(1, 1), padding="VALID",
        dimension_numbers=("NCHW", "OIHW", "NCHW")) / resol
    assert y.shape == (2, 1, 14, 14), y.shape
    assert jnp.allclose(y, y_ref, atol=1e-3, rtol=1e-4), float(
        jnp.max(jnp.abs(y - y_ref)))

    print("KERNEL_OK")
</pallas_src>

<mosaic_0001>
module attributes {stable_mosaic.version = 11 : i64} {
  func.func @_stencil_kernel(%arg0: i32, %arg1: memref<2x256xf32, #tpu.memory_space<vmem>>, %arg2: memref<2x256xf32, #tpu.memory_space<vmem>>) attributes {dimension_semantics = [#tpu.dimension_semantics<parallel>], iteration_bounds = array<i64: 1>, scalar_prefetch = 0 : i64, scratch_operands = 0 : i64, tpu.core_type = #tpu.core_type<tc>, window_params = [{transform_indices = @transform_0, window_bounds = array<i64: 2, 256>}, {transform_indices = @transform_1, window_bounds = array<i64: 2, 256>}]} {
    %c0 = arith.constant 0 : index
    %c0_0 = arith.constant 0 : index
    %0 = vector.load %arg1[%c0, %c0_0] : memref<2x256xf32, #tpu.memory_space<vmem>>, vector<2x256xf32>
    %c16_i32 = arith.constant 16 : i32
    %1 = tpu.dynamic_rotate %0 by %c16_i32 dim 1 : vector<2x256xf32>, i32 -> vector<2x256xf32>
    %c1_i32 = arith.constant 1 : i32
    %2 = tpu.dynamic_rotate %0 by %c1_i32 dim 1 : vector<2x256xf32>, i32 -> vector<2x256xf32>
    %3 = arith.addf %1, %2 : vector<2x256xf32>
    %c255_i32 = arith.constant 255 : i32
    %4 = tpu.dynamic_rotate %0 by %c255_i32 dim 1 : vector<2x256xf32>, i32 -> vector<2x256xf32>
    %5 = arith.addf %3, %4 : vector<2x256xf32>
    %c240_i32 = arith.constant 240 : i32
    %6 = tpu.dynamic_rotate %0 by %c240_i32 dim 1 : vector<2x256xf32>, i32 -> vector<2x256xf32>
    %7 = arith.addf %5, %6 : vector<2x256xf32>
    %cst = arith.constant 2.560000e+02 : f32
    %8 = vector.broadcast %cst : f32 to vector<2x256xf32>
    %9 = arith.mulf %7, %8 : vector<2x256xf32>
    %cst_1 = arith.constant -1.024000e+03 : f32
    %10 = vector.broadcast %cst_1 : f32 to vector<2x256xf32>
    %11 = arith.mulf %0, %10 : vector<2x256xf32>
    %12 = arith.addf %9, %11 : vector<2x256xf32>
    %c0_2 = arith.constant 0 : index
    %c0_3 = arith.constant 0 : index
    %13 = vector.load %arg2[%c0_2, %c0_3] : memref<2x256xf32, #tpu.memory_space<vmem>>, vector<2x256xf32>
    tpu.vector_store %arg2[%c0_2, %c0_3], %12 {strides = array<i32>} : memref<2x256xf32, #tpu.memory_space<vmem>>, vector<2x256xf32>,
    return
  }
  func.func @transform_0(%arg0: i32) -> (i32, i32) {
    %c0_i32 = arith.constant 0 : i32
    %c0_i32_0 = arith.constant 0 : i32
    return %arg0, %c0_i32 : i32, i32
  }
  func.func @transform_1(%arg0: i32) -> (i32, i32) {
    %c0_i32 = arith.constant 0 : i32
    %c0_i32_0 = arith.constant 0 : i32
    return %arg0, %c0_i32 : i32, i32
  }
}

</mosaic_0001>

<llo_original>
// kernel: tpu_custom_call.1
$region0: #{tpu_custom_call.1}
  #allocation0 [shape = 'u32[]', space=smem, size = 0x4, offset = 0x4, fixed_abs, tag = 'smem constant byte address 0x4 - core index']
  #allocation1 [shape = 'u32[144,128]{1,0:T(1,128)}', space=vmem, size = 0x12000, scoped, tag = 'internal scratch']
  %s0 = inlined_call_operand.hbm [shape: f32[2,256], index: 0, kind: input, shape index: {}]
  %s1 = inlined_call_operand.hbm [shape: f32[2,256], index: 1, kind: output, shape index: {}]
  %s2 = sld [smem:[#allocation0]]
  $region18: #{tpu_custom_call.1} parent=0
    _
  %s4 = ssub.s32 1, %s2
  %s5 = scalar_select 0, %s4, %s2
  $region1: #{tpu_custom_call.1} parent=0
    #allocation2 [shape = 'u8[2048]{0}', space=vmem, size = 0x800, scoped, tag = 'input window, operand 0, single buffered']
    #allocation3 [shape = 's32[1]{0}', space=sflag, size = 0x4, scoped, tag = 'scoped memory for tpu_custom_call.1']
    #allocation4 [shape = 's32[1]{0}', space=sflag, size = 0x4, scoped, tag = 'scoped memory for tpu_custom_call.1']
    #allocation5 [shape = 'u8[2048]{0}', space=vmem, size = 0x800, scoped, tag = 'output window, operand 0, single buffered']
    %6 = vsyncpa [#allocation3], 0
    %7 = vsyncpa [#allocation4], 0
    // Predicated region
    $region2: #{tpu_custom_call.1} parent=1 // pred_check
      _
    $region3: #{tpu_custom_call.1} parent=1 // pred_check_branch
      %9 = sbr.rel (0) target = $region5
    $region4: #{tpu_custom_call.1} parent=1 // pred_region
      %s11 = ssub.s32 64, 64
      %12 = vsyncadd [#allocation3], %s11
      %s14 = sshll.u32 [#allocation2], 4
      %s15 = int_to_ptr.vmem [resolvable:$true] %s14
      %17 = dma.hbm_to_vmem [thread:$0]  %s0, 64, %s15, [#allocation3]
    $region5: #{tpu_custom_call.1} parent=1 // pred_fallthru
      _
    // Predicated region
    $region6: #{tpu_custom_call.1} parent=1 // pred_check
      _
    $region7: #{tpu_custom_call.1} parent=1 // pred_check_branch
      %19 = sbr.rel (0) target = $region9
    $region8: #{tpu_custom_call.1} parent=1 // pred_region
      %20 = dma.done [#allocation3], 64
    $region9: #{tpu_custom_call.1} parent=1 // pred_fallthru
      _
    %v21 = vld [vmem:[#allocation2] sm:$0xf]
    %v24 = vunpack.c.l.s4 1983009808
    %v25 = vunpack.c.0.s8 %v24
    %v26 = vlaneseq
    %v27 = vshrl.u32 %v26, 7
    %v28 = vsub.s32 %v25, %v27
    %v29 = vrot.slane %v21, %v28
    %v30 = vcombine.high %v29, %v29
    %33 = vrot.lane.b32.xlu0 %v29, 16
    %v34 = vpop.permute.xlu0 %33
    %35 = vrot.lane.b32.xlu0 %v30, 16
    %v36 = vpop.permute.xlu0 %35
    %v37 = vlaneseq
    %v38 = vand.u32 %v37, 127
    %vm39 = vcmp.lt.s32.totalorder %v38, 16
    %v40 = vsel %vm39, %v34, %v36
    %v41 = vsel %vm39, %v36, %v34
    %42 = vrot.lane.b32.xlu0 %v29, 1
    %v43 = vpop.permute.xlu0 %42
    %44 = vrot.lane.b32.xlu0 %v30, 1
    %v45 = vpop.permute.xlu0 %44
    %vm46 = vcmp.lt.s32.totalorder %v38, 1
    %v47 = vsel %vm46, %v43, %v45
    %v48 = vsel %vm46, %v45, %v43
    %v49 = vadd.f32 %v41, %v48
    %v50 = vadd.f32 %v40, %v47
    %51 = vrot.lane.b32.xlu0 %v29, 127
    %v52 = vpop.permute.xlu0 %51
    %53 = vrot.lane.b32.xlu0 %v30, 127
    %v54 = vpop.permute.xlu0 %53
    %vm55 = vcmp.lt.s32.totalorder %v38, 127
    %v56 = vsel %vm55, %v52, %v54
    %v57 = vsel %vm55, %v54, %v52
    %v58 = vadd.f32 %v49, %v56
    %v59 = vadd.f32 %v50, %v57
    %60 = vrot.lane.b32.xlu0 %v29, 112
    %v61 = vpop.permute.xlu0 %60
    %62 = vrot.lane.b32.xlu0 %v30, 112
    %v63 = vpop.permute.xlu0 %62
    %vm64 = vcmp.lt.s32.totalorder %v38, 112
    %v65 = vsel %vm64, %v61, %v63
    %v66 = vsel %vm64, %v63, %v61
    %v67 = vadd.f32 %v58, %v65
    %v68 = vadd.f32 %v59, %v66
    %v69 = vmul.f32 %v67, 256.0
    %v70 = vmul.f32 %v68, 256.0
    %v71 = vmul.f32 %v21, -1024.0
    %v74 = vunpack.c.l.s4 1983009808
    %v75 = vunpack.c.0.s8 %v74
    %v76 = vlaneseq
    %v77 = vshrl.u32 %v76, 7
    %v78 = vsub.s32 %v75, %v77
    %v79 = vrot.slane %v71, %v78
    %v80 = vcombine.high %v79, %v79
    %v83 = vadd.f32 %v69, %v79
    %v84 = vadd.f32 %v70, %v80
    %v87 = vcombine.low %v83, %v84
    %v89 = vunpack.c.l.s4 1983009808
    %v90 = vunpack.c.0.s8 %v89
    %v91 = vlaneseq
    %v92 = vshrl.u32 %v91, 7
    %v93 = vsub.s32 %v90, %v92
    %v94 = vrot.slane %v87, %v93
    %96 = vst [vmem:[#allocation5] sm:$0xf] %v94
    // Predicated region
    $region10: #{tpu_custom_call.1} parent=1 // pred_check
      _
    $region11: #{tpu_custom_call.1} parent=1 // pred_check_branch
      %98 = sbr.rel (0) target = $region13
    $region12: #{tpu_custom_call.1} parent=1 // pred_region
      %s100 = ssub.s32 64, 64
      %101 = vsyncadd [#allocation4], %s100
      %s103 = sshll.u32 [#allocation5], 4
      %s104 = int_to_ptr.vmem [resolvable:$true] %s103
      %106 = dma.vmem_to_hbm [thread:$0]  %s104, 64, %s1, [#allocation4]
    $region13: #{tpu_custom_call.1} parent=1 // pred_fallthru
      _
    // Predicated region
    $region14: #{tpu_custom_call.1} parent=1 // pred_check
      _
    $region15: #{tpu_custom_call.1} parent=1 // pred_check_branch
      %108 = sbr.rel (0) target = $region17
    $region16: #{tpu_custom_call.1} parent=1 // pred_region
      %109 = dma.done [#allocation4], 64
    $region17: #{tpu_custom_call.1} parent=1 // pred_fallthru
      _
    %110 = vsyncpa [#allocation3], 1
    %111 = vsyncpa [#allocation4], 1

</llo_original>
